<compile_context>
chip_gen: v7x
topology: tpu7x:2x2x1
jax: 0.10.0
libtpu: 0.0.40
codegen_flags: <defaults>
</compile_context>

<pallas_src>
import jax
import jax.numpy as jnp
from jax.experimental import pallas as pl
from jax.experimental.pallas import tpu as pltpu

HIDDEN = 64  # PyTorch hidden width (nn.Linear(feature_dim, 64))


def _round_up(v, m):
    return (v + m - 1) // m * m


def _cdiv(a, b):
    return -(-a // b)


def _vmem_limit_bytes():
    """Explicit scoped-VMEM limit: generous, generation-aware, with headroom."""
    try:
        cap = int(pltpu.get_tpu_info().vmem_capacity_bytes)
    except Exception:
        cap = 64 << 20  # conservative fallback (v7x per-TC physical size)
    return int(min(cap * 3 // 4, 96 << 20))


def _task_classifier_kernel(x_ref, w1_ref, b1_ref, w2_ref, b2_ref, o_ref):
    # Layer 1: Linear(F -> hidden, lane-padded to 128); bf16 MXU, f32 accumulate.
    x = x_ref[...].astype(jnp.bfloat16)          # no-op if caller already passes bf16
    h = jnp.dot(x, w1_ref[...], preferred_element_type=jnp.float32)
    h = jnp.maximum(h + b1_ref[...], 0.0)        # bias + ReLU
    # Dropout(p=0.3): identity in eval mode.
    # Layer 2: Linear(hidden_padded -> num_classes).  Narrow-N matmul + narrow
    # store: only num_classes lanes are written back to HBM.
    out = jnp.dot(h.astype(jnp.bfloat16), w2_ref[...],
                  preferred_element_type=jnp.float32)
    o_ref[...] = (out + b2_ref[...]).astype(o_ref.dtype)


def task_classifier_forward(x, w1, b1, w2, b2, *, block_m=4096, vmem_limit_bytes=None):
    """Fused TaskClassifier forward.

    x:  (B, F)  f32 or bf16;  w1: (F, 64);  b1: (1, 64) or (64,);
    w2: (64, C);  b2: (1, C) or (C,)   (weights stored (in, out), i.e. PyTorch W.T).
    Returns (B, C) f32 logits.
    """
    batch, feat = x.shape
    hidden, num_classes = w2.shape
    assert w1.shape == (feat, hidden), "w1 must be (feature_dim, hidden)"
    h_pad = _round_up(hidden, 128)

    # --- Lane-pad the hidden dim once; cast matmul weights to bf16 (zero padding is exact).
    w1p = jnp.zeros((feat, h_pad), jnp.float32).at[:, :hidden].set(w1).astype(jnp.bfloat16)
    b1p = jnp.zeros((1, h_pad), jnp.float32).at[:, :hidden].set(
        jnp.asarray(b1, jnp.float32).reshape(1, hidden))
    w2p = jnp.zeros((h_pad, num_classes), jnp.float32).at[:hidden, :].set(w2).astype(jnp.bfloat16)
    b2r = jnp.asarray(b2, jnp.float32).reshape(1, num_classes)

    if vmem_limit_bytes is None:
        vmem_limit_bytes = _vmem_limit_bytes()

    # --- Adaptive batch tile.
    x_itemsize = jnp.dtype(x.dtype).itemsize
    weight_bytes = w1p.size * 2 + w2p.size * 2 + b1p.size * 4 + b2r.size * 4
    # Per-row VMEM: double-buffered x + double-buffered out + f32 intermediates.
    per_row = (2 * feat * x_itemsize + 2 * num_classes * 4
               + h_pad * 4 + _round_up(num_classes, 128) * 4)
    budget = max(vmem_limit_bytes // 2 - 2 * weight_bytes, 1 << 20)
    tm_vmem = max(8, (budget // per_row) // 8 * 8)
    tm_max = max(8, min(block_m, tm_vmem))

    rows = _round_up(batch, 8)
    if rows <= 8:
        n_steps = 1                      # tiny batch: single step is fine
    else:
        # >=2 steps (v7x megacore), and balance steps to avoid padding waste.
        n_steps = max(2, _cdiv(rows, tm_max))
    tm = min(tm_max, _round_up(_cdiv(rows, n_steps), 8))
    n_steps = _cdiv(rows, tm)
    b_pad = n_steps * tm

    if b_pad != batch:
        x = jnp.pad(x, ((0, b_pad - batch), (0, 0)))
    grid = (n_steps,)

    flops = 2 * b_pad * (feat * h_pad + h_pad * num_classes)
    bytes_accessed = (b_pad * feat * x_itemsize
                      + b_pad * num_classes * 4
                      + weight_bytes)

    out = pl.pallas_call(
        _task_classifier_kernel,
        out_shape=jax.ShapeDtypeStruct((b_pad, num_classes), jnp.float32),
        grid_spec=pltpu.PrefetchScalarGridSpec(
            num_scalar_prefetch=0,
            grid=grid,
            in_specs=[
                pl.BlockSpec((tm, feat), lambda i: (i, 0)),            # x: streamed per tile
                pl.BlockSpec((feat, h_pad), lambda i: (0, 0)),         # w1: VMEM-resident
                pl.BlockSpec((1, h_pad), lambda i: (0, 0)),            # b1: VMEM-resident
                pl.BlockSpec((h_pad, num_classes), lambda i: (0, 0)),  # w2: VMEM-resident
                pl.BlockSpec((1, num_classes), lambda i: (0, 0)),      # b2: VMEM-resident
            ],
            # Narrow output: last dim == full array dim, so (8,128) rule holds;
            # ~12.8x fewer writeback bytes than a 128-lane padded f32 store.
            out_specs=pl.BlockSpec((tm, num_classes), lambda i: (i, 0)),
        ),
        compiler_params=pltpu.CompilerParams(
            dimension_semantics=("parallel",),          # megacore-shard batch axis (v7x)
            vmem_limit_bytes=int(vmem_limit_bytes),     # v5e default is only 16 MiB
        ),
        cost_estimate=pl.CostEstimate(
            flops=flops, transcendentals=0, bytes_accessed=bytes_accessed),
    )(x, w1p, b1p, w2p, b2r)

    return out[:batch]  # drop padded batch rows; columns are already num_classes


def init_params(key, feature_dim, num_classes, hidden=HIDDEN):
    """PyTorch nn.Linear default init: U[-1/sqrt(fan_in), 1/sqrt(fan_in)]."""
    k1, k2, k3, k4 = jax.random.split(key, 4)
    bound1 = 1.0 / jnp.sqrt(feature_dim)
    bound2 = 1.0 / jnp.sqrt(hidden)
    w1 = jax.random.uniform(k1, (feature_dim, hidden), jnp.float32, -bound1, bound1)
    b1 = jax.random.uniform(k2, (1, hidden), jnp.float32, -bound1, bound1)
    w2 = jax.random.uniform(k3, (hidden, num_classes), jnp.float32, -bound2, bound2)
    b2 = jax.random.uniform(k4, (1, num_classes), jnp.float32, -bound2, bound2)
    return w1, b1, w2, b2


def reference_forward(x, w1, b1, w2, b2):
    """Plain-JAX (f32) reference for correctness check."""
    xf = x.astype(jnp.float32)
    h = jnp.maximum(xf @ w1 + b1, 0.0)
    return h @ w2 + b2


if __name__ == "__main__":
    feature_dim, num_classes = 32, 10
    key = jax.random.PRNGKey(0)
    kx, kp, kx2 = jax.random.split(key, 3)
    w1, b1, w2, b2 = init_params(kp, feature_dim, num_classes)

    # 1) Small case (single grid step), f32 input.
    batch = 8
    x = jax.random.normal(kx, (batch, feature_dim), jnp.float32)
    out = jax.block_until_ready(task_classifier_forward(x, w1, b1, w2, b2))
    ref = reference_forward(x, w1, b1, w2, b2)
    assert out.shape == (batch, num_classes)
    # bf16 MXU inputs with f32 accumulation -> relaxed tolerance vs f32 reference.
    assert jnp.allclose(out, ref, atol=2e-2, rtol=2e-2), "mismatch vs JAX reference (small)"

    # 2) Larger, non-tile-multiple batch: exercises adaptive tiling (>=2 grid steps)
    #    + row padding + narrow output writeback.
    batch2 = 1000
    x2 = jax.random.normal(kx2, (batch2, feature_dim), jnp.float32)
    out2 = jax.block_until_ready(task_classifier_forward(x2, w1, b1, w2, b2))
    ref2 = reference_forward(x2, w1, b1, w2, b2)
    assert out2.shape == (batch2, num_classes)
    assert jnp.allclose(out2, ref2, atol=2e-2, rtol=2e-2), "mismatch vs JAX reference (tiled)"

    # 3) bf16 input path (features handed over in bf16 by the DANN feature extractor):
    #    halves the input read stream; in-kernel astype(bf16) becomes a no-op.
    x3 = x2.astype(jnp.bfloat16)
    out3 = jax.block_until_ready(task_classifier_forward(x3, w1, b1, w2, b2))
    ref3 = reference_forward(x3, w1, b1, w2, b2)   # reference on the same bf16-quantized x
    assert out3.shape == (batch2, num_classes)
    assert jnp.allclose(out3, ref3, atol=2e-2, rtol=2e-2), "mismatch vs JAX reference (bf16 x)"

    print("KERNEL_OK")
</pallas_src>

<mosaic_0001>
module attributes {stable_mosaic.version = 11 : i64} {
  func.func @_task_classifier_kernel(%arg0: i32, %arg1: memref<8x32xf32, #tpu.memory_space<vmem>>, %arg2: memref<32x128xbf16, #tpu.memory_space<vmem>>, %arg3: memref<1x128xf32, #tpu.memory_space<vmem>>, %arg4: memref<128x10xbf16, #tpu.memory_space<vmem>>, %arg5: memref<1x10xf32, #tpu.memory_space<vmem>>, %arg6: memref<8x10xf32, #tpu.memory_space<vmem>>) attributes {dimension_semantics = [#tpu.dimension_semantics<parallel>], iteration_bounds = array<i64: 1>, scalar_prefetch = 0 : i64, scratch_operands = 0 : i64, tpu.core_type = #tpu.core_type<tc>, window_params = [{transform_indices = @transform_0, window_bounds = array<i64: 8, 32>}, {pipeline_mode = #tpu.pipeline_mode<synchronous>, transform_indices = @transform_1, window_bounds = array<i64: 32, 128>}, {pipeline_mode = #tpu.pipeline_mode<synchronous>, transform_indices = @transform_2, window_bounds = array<i64: 1, 128>}, {pipeline_mode = #tpu.pipeline_mode<synchronous>, transform_indices = @transform_3, window_bounds = array<i64: 128, 10>}, {pipeline_mode = #tpu.pipeline_mode<synchronous>, transform_indices = @transform_4, window_bounds = array<i64: 1, 10>}, {transform_indices = @transform_5, window_bounds = array<i64: 8, 10>}]} {
    %c0 = arith.constant 0 : index
    %c0_0 = arith.constant 0 : index
    %0 = vector.load %arg1[%c0, %c0_0] : memref<8x32xf32, #tpu.memory_space<vmem>>, vector<8x32xf32>
    %1 = arith.truncf %0 : vector<8x32xf32> to vector<8x32xbf16>
    %c0_1 = arith.constant 0 : index
    %c0_2 = arith.constant 0 : index
    %2 = vector.load %arg2[%c0_1, %c0_2] : memref<32x128xbf16, #tpu.memory_space<vmem>>, vector<32x128xbf16>
    %cst = arith.constant dense<0.000000e+00> : vector<8x128xf32>
    %3 = tpu.matmul %1, %2, %cst {dimension_numbers = #tpu.dot_dimension_numbers<[1], [0], [0], [1], [0, 0, 1, 1], [], []>} : vector<8x32xbf16>, vector<32x128xbf16>, vector<8x128xf32> -> vector<8x128xf32>
    %c0_3 = arith.constant 0 : index
    %c0_4 = arith.constant 0 : index
    %4 = vector.load %arg3[%c0_3, %c0_4] : memref<1x128xf32, #tpu.memory_space<vmem>>, vector<1x128xf32>
    %5 = vector.broadcast %4 : vector<1x128xf32> to vector<8x128xf32>
    %6 = arith.addf %3, %5 : vector<8x128xf32>
    %cst_5 = arith.constant 0.000000e+00 : f32
    %7 = vector.broadcast %cst_5 : f32 to vector<8x128xf32>
    %8 = arith.maximumf %6, %7 : vector<8x128xf32>
    %9 = arith.truncf %8 : vector<8x128xf32> to vector<8x128xbf16>
    %c0_6 = arith.constant 0 : index
    %c0_7 = arith.constant 0 : index
    %10 = vector.load %arg4[%c0_6, %c0_7] : memref<128x10xbf16, #tpu.memory_space<vmem>>, vector<128x10xbf16>
    %cst_8 = arith.constant dense<0.000000e+00> : vector<8x10xf32>
    %11 = tpu.matmul %9, %10, %cst_8 {dimension_numbers = #tpu.dot_dimension_numbers<[1], [0], [0], [1], [0, 0, 1, 1], [], []>} : vector<8x128xbf16>, vector<128x10xbf16>, vector<8x10xf32> -> vector<8x10xf32>
    %c0_9 = arith.constant 0 : index
    %c0_10 = arith.constant 0 : index
    %12 = vector.load %arg5[%c0_9, %c0_10] : memref<1x10xf32, #tpu.memory_space<vmem>>, vector<1x10xf32>
    %13 = vector.broadcast %12 : vector<1x10xf32> to vector<8x10xf32>
    %14 = arith.addf %11, %13 : vector<8x10xf32>
    %c0_11 = arith.constant 0 : index
    %c0_12 = arith.constant 0 : index
    %15 = vector.load %arg6[%c0_11, %c0_12] : memref<8x10xf32, #tpu.memory_space<vmem>>, vector<8x10xf32>
    tpu.vector_store %arg6[%c0_11, %c0_12], %14 {strides = array<i32>} : memref<8x10xf32, #tpu.memory_space<vmem>>, vector<8x10xf32>,
    return
  }
  func.func @transform_0(%arg0: i32) -> (i32, i32) {
    %c0_i32 = arith.constant 0 : i32
    %c0_i32_0 = arith.constant 0 : i32
    return %arg0, %c0_i32 : i32, i32
  }
  func.func @transform_1(%arg0: i32) -> (i32, i32) {
    %c0_i32 = arith.constant 0 : i32
    %c0_i32_0 = arith.constant 0 : i32
    %c0_i32_1 = arith.constant 0 : i32
    return %c0_i32, %c0_i32_0 : i32, i32
  }
  func.func @transform_2(%arg0: i32) -> (i32, i32) {
    %c0_i32 = arith.constant 0 : i32
    %c0_i32_0 = arith.constant 0 : i32
    %c0_i32_1 = arith.constant 0 : i32
    return %c0_i32, %c0_i32_0 : i32, i32
  }
  func.func @transform_3(%arg0: i32) -> (i32, i32) {
    %c0_i32 = arith.constant 0 : i32
    %c0_i32_0 = arith.constant 0 : i32
    %c0_i32_1 = arith.constant 0 : i32
    return %c0_i32, %c0_i32_0 : i32, i32
  }
  func.func @transform_4(%arg0: i32) -> (i32, i32) {
    %c0_i32 = arith.constant 0 : i32
    %c0_i32_0 = arith.constant 0 : i32
    %c0_i32_1 = arith.constant 0 : i32
    return %c0_i32, %c0_i32_0 : i32, i32
  }
  func.func @transform_5(%arg0: i32) -> (i32, i32) {
    %c0_i32 = arith.constant 0 : i32
    %c0_i32_0 = arith.constant 0 : i32
    return %arg0, %c0_i32 : i32, i32
  }
}

</mosaic_0001>

<llo_original>
// kernel: tpu_custom_call.1
$region0: #{tpu_custom_call.1}
  #allocation0 [shape = 'u32[]', space=smem, size = 0x4, offset = 0x4, fixed_abs, tag = 'smem constant byte address 0x4 - core index']
  #allocation1 [shape = 'u32[144,128]{1,0:T(1,128)}', space=vmem, size = 0x12000, scoped, tag = 'internal scratch']
  %s0 = inlined_call_operand.vmem [shape: f32[8,32], index: 0, kind: input, shape index: {}]
  %s1 = inlined_call_operand.vmem [shape: bf16[32,128], index: 1, kind: input, shape index: {}]
  %s2 = inlined_call_operand.vmem [shape: f32[1,128], index: 2, kind: input, shape index: {}]
  %s3 = inlined_call_operand.vmem [shape: bf16[128,10], index: 3, kind: input, shape index: {}]
  %s4 = inlined_call_operand.vmem [shape: f32[1,10], index: 4, kind: input, shape index: {}]
  %s5 = inlined_call_operand.hbm [shape: f32[8,10], index: 5, kind: output, shape index: {}]
  %s6 = sld [smem:[#allocation0]]
  $region30: #{tpu_custom_call.1} parent=0
    _
  %s8 = ssub.s32 1, %s6
  %s9 = scalar_select 0, %s8, %s6
  $region1: #{tpu_custom_call.1} parent=0
    #allocation2 [shape = 'u8[4096]{0}', space=vmem, size = 0x1000, scoped, tag = 'output window, operand 0, single buffered']
    #allocation3 [shape = 's32[1]{0}', space=sflag, size = 0x4, scoped, tag = 'scoped memory for tpu_custom_call.1']
    %10 = vsyncpa [#allocation3], 0
    // Predicated region
    $region2: #{tpu_custom_call.1} parent=1 // pred_check
      _
    $region3: #{tpu_custom_call.1} parent=1 // pred_check_branch
      %12 = sbr.rel (0) target = $region5
    $region4: #{tpu_custom_call.1} parent=1 // pred_region
      _
    $region5: #{tpu_custom_call.1} parent=1 // pred_fallthru
      _
    // Predicated region
    $region6: #{tpu_custom_call.1} parent=1 // pred_check
      _
    $region7: #{tpu_custom_call.1} parent=1 // pred_check_branch
      %14 = sbr.rel (0) target = $region9
    $region8: #{tpu_custom_call.1} parent=1 // pred_region
      _
    $region9: #{tpu_custom_call.1} parent=1 // pred_fallthru
      _
    // Predicated region
    $region10: #{tpu_custom_call.1} parent=1 // pred_check
      _
    $region11: #{tpu_custom_call.1} parent=1 // pred_check_branch
      %16 = sbr.rel (0) target = $region13
    $region12: #{tpu_custom_call.1} parent=1 // pred_region
      _
    $region13: #{tpu_custom_call.1} parent=1 // pred_fallthru
      _
    // Predicated region
    $region14: #{tpu_custom_call.1} parent=1 // pred_check
      _
    $region15: #{tpu_custom_call.1} parent=1 // pred_check_branch
      %18 = sbr.rel (0) target = $region17
    $region16: #{tpu_custom_call.1} parent=1 // pred_region
      _
    $region17: #{tpu_custom_call.1} parent=1 // pred_fallthru
      _
    // Predicated region
    $region18: #{tpu_custom_call.1} parent=1 // pred_check
      _
    $region19: #{tpu_custom_call.1} parent=1 // pred_check_branch
      %20 = sbr.rel (0) target = $region21
    $region20: #{tpu_custom_call.1} parent=1 // pred_region
      _
    $region21: #{tpu_custom_call.1} parent=1 // pred_fallthru
      _
    %v22 = vld [vmem:[%s0] sm:$0xff]
    %v23 = vpack.c.bf16 %v22, %v22
    %v24 = vld [vmem:[%s1] sm:$0xf]
    %v25 = vld [vmem:[%s1 + $0x4] sm:$0xf]
    %v26 = vld [vmem:[%s1 + $0x8] sm:$0xf]
    %v27 = vld [vmem:[%s1 + $0xc] sm:$0xf]
    %v28 = vld [vmem:[%s2] sm:$0x1]
    %v30 = vlaneseq
    %v31 = vshrl.u32 %v30, 7
    %v32 = vsub.s32 0, %v31
    %v33 = vrot.slane %v28, %v32
    %v39 = vunpack.c.l.b16 %v24
    %v40 = vunpack.c.l.b16 %v25
    %v41 = vunpack.c.l.b16 %v26
    %v42 = vunpack.c.l.b16 %v27
    %v43 = vpack.c.b16 %v40, %v39
    %v44 = vpack.c.b16 %v42, %v41
    %vm47 = vcmask 261120
    %v49 = vsel %vm47, %v23, 0
    %51 = vmatprep.subr.bf16.mxu0 0
    %52 = vmatpush1.bf16.msra.mxu0 %v43
    %53 = vmatprep.subr.bf16.mxu0 0
    %54 = vmatpush1.bf16.msra.mxu0 %v44
    %55 = vmatprep.subr.bf16.mxu0 0
    %56 = vmatpush1.bf16.msra.mxu0 0
    %57 = vmatprep.subr.bf16.mxu0 0
    %58 = vmatpush1.bf16.msra.mxu0 0
    %59 = vmatprep.subr.bf16.mxu0 0
    %60 = vmatpush1.bf16.msra.mxu0 0
    %61 = vmatprep.subr.bf16.mxu0 0
    %62 = vmatpush1.bf16.msra.mxu0 0
    %63 = vmatprep.subr.bf16.mxu0 0
    %64 = vmatpush1.bf16.msra.mxu0 0
    %65 = vmatprep.subr.bf16.mxu0 0
    %66 = vmatpush1.bf16.msra.mxu0 0
    %67 = vmatprep.subr.bf16.mxu0 0
    %68 = vmatpush1.bf16.msra.mxu0 0
    %69 = vmatprep.subr.bf16.mxu0 0
    %70 = vmatpush1.bf16.msra.mxu0 0
    %71 = vmatprep.subr.bf16.mxu0 0
    %72 = vmatpush1.bf16.msra.mxu0 0
    %73 = vmatprep.subr.bf16.mxu0 0
    %74 = vmatpush1.bf16.msra.mxu0 0
    %75 = vmatprep.subr.bf16.mxu0 0
    %76 = vmatpush1.bf16.msra.mxu0 0
    %77 = vmatprep.subr.bf16.mxu0 0
    %78 = vmatpush1.bf16.msra.mxu0 0
    %79 = vmatprep.subr.bf16.mxu0 0
    %80 = vmatpush1.bf16.msra.mxu0 0
    %81 = vmatprep.subr.bf16.mxu0 0
    %82 = vmatpush1.bf16.msra.mxu0 0
    %83 = vmatprep.mubr.bf16.mxu0 0
    %84 = vmatmul.mubr.bf16.gmra.mrb[0].mxu0 %v49
    %v85 = vpop.f32.mrb[0].mxu0
    %v86 = vadd.f32 %v33, %v85
    %v87 = vpop.f32.mrb[0].mxu0
    %v88 = vpop.f32.mrb[0].mxu0
    %v89 = vpop.f32.mrb[0].mxu0
    %90 = vdwg.mxu0
    %v91 = vmax.f32 %v86, 0.0
    %v92 = vpack.c.bf16 %v91, %v91
    %v93 = vld [vmem:[%s3] sm:$0xf]
    %v94 = vld [vmem:[%s3 + $0x4] sm:$0xf]
    %v95 = vld [vmem:[%s3 + $0x8] sm:$0xf]
    %v96 = vld [vmem:[%s3 + $0xc] sm:$0xf]
    %v97 = vld [vmem:[%s3 + $0x10] sm:$0xf]
    %v98 = vld [vmem:[%s3 + $0x14] sm:$0xf]
    %v99 = vld [vmem:[%s3 + $0x18] sm:$0xf]
    %v100 = vld [vmem:[%s3 + $0x1c] sm:$0xf]
    %v101 = vld [vmem:[%s3 + $0x20] sm:$0xf]
    %v102 = vld [vmem:[%s3 + $0x24] sm:$0xf]
    %v103 = vld [vmem:[%s3 + $0x28] sm:$0xf]
    %v104 = vld [vmem:[%s3 + $0x2c] sm:$0xf]
    %v105 = vld [vmem:[%s3 + $0x30] sm:$0xf]
    %v106 = vld [vmem:[%s3 + $0x34] sm:$0xf]
    %v107 = vld [vmem:[%s3 + $0x38] sm:$0xf]
    %v108 = vld [vmem:[%s3 + $0x3c] sm:$0xf]
    %v109 = vld [vmem:[%s4] sm:$0x1]
    %v111 = vlaneseq
    %v112 = vshrl.u32 %v111, 7
    %v113 = vsub.s32 0, %v112
    %v114 = vrot.slane %v109, %v113
    %v132 = vunpack.c.l.b16 %v93
    %v133 = vunpack.c.l.b16 %v94
    %v134 = vunpack.c.l.b16 %v95
    %v135 = vunpack.c.l.b16 %v96
    %v136 = vunpack.c.l.b16 %v97
    %v137 = vunpack.c.l.b16 %v98
    %v138 = vunpack.c.l.b16 %v99
    %v139 = vunpack.c.l.b16 %v100
    %v140 = vunpack.c.l.b16 %v101
    %v141 = vunpack.c.l.b16 %v102
    %v142 = vunpack.c.l.b16 %v103
    %v143 = vunpack.c.l.b16 %v104
    %v144 = vunpack.c.l.b16 %v105
    %v145 = vunpack.c.l.b16 %v106
    %v146 = vunpack.c.l.b16 %v107
    %v147 = vunpack.c.l.b16 %v108
    %v148 = vpack.c.b16 %v133, %v132
    %v149 = vpack.c.b16 %v135, %v134
    %v150 = vpack.c.b16 %v137, %v136
    %v151 = vpack.c.b16 %v139, %v138
    %v152 = vpack.c.b16 %v141, %v140
    %v153 = vpack.c.b16 %v143, %v142
    %v154 = vpack.c.b16 %v145, %v144
    %v155 = vpack.c.b16 %v147, %v146
    %164 = vmatprep.subr.bf16.mxu0 0
    %165 = vmatpush1.bf16.msra.mxu0 %v148
    %166 = vmatprep.subr.bf16.mxu0 0
    %167 = vmatpush1.bf16.msra.mxu0 %v149
    %168 = vmatprep.subr.bf16.mxu0 0
    %169 = vmatpush1.bf16.msra.mxu0 %v150
    %170 = vmatprep.subr.bf16.mxu0 0
    %171 = vmatpush1.bf16.msra.mxu0 %v151
    %172 = vmatprep.subr.bf16.mxu0 0
    %173 = vmatpush1.bf16.msra.mxu0 %v152
    %174 = vmatprep.subr.bf16.mxu0 0
    %175 = vmatpush1.bf16.msra.mxu0 %v153
    %176 = vmatprep.subr.bf16.mxu0 0
    %177 = vmatpush1.bf16.msra.mxu0 %v154
    %178 = vmatprep.subr.bf16.mxu0 0
    %179 = vmatpush1.bf16.msra.mxu0 %v155
    %180 = vmatprep.subr.bf16.mxu0 0
    %181 = vmatpush1.bf16.msra.mxu0 0
    %182 = vmatprep.subr.bf16.mxu0 0
    %183 = vmatpush1.bf16.msra.mxu0 0
    %184 = vmatprep.subr.bf16.mxu0 0
    %185 = vmatpush1.bf16.msra.mxu0 0
    %186 = vmatprep.subr.bf16.mxu0 0
    %187 = vmatpush1.bf16.msra.mxu0 0
    %188 = vmatprep.subr.bf16.mxu0 0
    %189 = vmatpush1.bf16.msra.mxu0 0
    %190 = vmatprep.subr.bf16.mxu0 0
    %191 = vmatpush1.bf16.msra.mxu0 0
    %192 = vmatprep.subr.bf16.mxu0 0
    %193 = vmatpush1.bf16.msra.mxu0 0
    %194 = vmatprep.subr.bf16.mxu0 0
    %195 = vmatpush1.bf16.msra.mxu0 0
    %196 = vmatprep.mubr.bf16.mxu0 0
    %197 = vmatmul.mubr.bf16.gmra.mrb[0].mxu0 %v92
    %v198 = vpop.f32.mrb[0].mxu0
    %v199 = vadd.f32 %v114, %v198
    %v200 = vpop.f32.mrb[0].mxu0
    %v201 = vpop.f32.mrb[0].mxu0
    %v202 = vpop.f32.mrb[0].mxu0
    %203 = vdwg.mxu0
    %vm204 = vcmask 80896
    %205 = vst.msk [vmem:[#allocation2] sm:$0xff] %vm204, %v199
    // Predicated region
    $region22: #{tpu_custom_call.1} parent=1 // pred_check
      _
    $region23: #{tpu_custom_call.1} parent=1 // pred_check_branch
      %207 = sbr.rel (0) target = $region25
    $region24: #{tpu_custom_call.1} parent=1 // pred_region
      %s209 = ssub.s32 128, 128
      %210 = vsyncadd [#allocation3], %s209
      %s212 = sshll.u32 [#allocation2], 4
      %s213 = int_to_ptr.vmem [resolvable:$true] %s212
      %215 = dma.vmem_to_hbm [thread:$0]  %s213, 128, %s5, [#allocation3]
    $region25: #{tpu_custom_call.1} parent=1 // pred_fallthru
      _
    // Predicated region
    $region26: #{tpu_custom_call.1} parent=1 // pred_check
      _
    $region27: #{tpu_custom_call.1} parent=1 // pred_check_branch
      %217 = sbr.rel (0) target = $region29
    $region28: #{tpu_custom_call.1} parent=1 // pred_region
      %218 = dma.done [#allocation3], 128
    $region29: #{tpu_custom_call.1} parent=1 // pred_fallthru
      _
    %219 = vsyncpa [#allocation3], 1

</llo_original>
